<compile_context>
chip_gen: v7x
topology: tpu7x:2x2x1
jax: 0.10.0
libtpu: 0.0.40
codegen_flags: <defaults>
</compile_context>

<pallas_src>
import jax
import jax.numpy as jnp
from jax.experimental import pallas as pl
from jax.experimental.pallas import tpu as pltpu


def _gcn_spatial_kernel(x_ref, g_ref, w_ref, shift_ref, o_ref):
    # Per grid step (one batch element, TT frames):
    #   x_ref:     (TT, V, Cin)   channels-last activations (bf16 or f32)
    #   g_ref:     (TT, V, V)     per-frame adjacency
    #   w_ref:     (2*Cin, Cout)  stacked [w1; w2] with BatchNorm scale folded in
    #   shift_ref: (1, Cout)      folded conv-bias + BatchNorm shift (f32)
    #   o_ref:     (TT, V, Cout)  output slab (f32)
    x = x_ref[...]                       # (TT, V, Cin)
    g = g_ref[...]                       # (TT, V, V)
    tt, v, cin = x.shape
    cout = o_ref.shape[-1]

    # Graph aggregation: per-frame (V,V)@(V,Cin), batched over the TT frames.
    agg = jnp.einsum('tuv,tvc->tuc', g, x,
                     preferred_element_type=jnp.float32)      # (TT, V, Cin) f32

    # Fused channel projection for both conv paths:
    #   [g@x, x] @ [w1*s ; w2*s]  ==  (g@x)@w1*s + x@w2*s
    feat = jnp.concatenate(
        [agg.astype(x.dtype).reshape(tt * v, cin),
         x.reshape(tt * v, cin)],
        axis=-1)                                              # (TT*V, 2*Cin)
    y = jnp.dot(feat, w_ref[...],
                preferred_element_type=jnp.float32)           # (TT*V, Cout) f32

    # Folded conv-bias + BatchNorm shift, then ReLU.
    y = jnp.maximum(y + shift_ref[...], 0.0)

    # NOTE: when Cout is a multiple of 128 (the usual SGN regime: 128/256) the
    # store below is lane-dense/unmasked; tiny Cout (as in the unit test) falls
    # back to masked partial stores.
    o_ref[...] = y.reshape(tt, v, cout).astype(o_ref.dtype)


def _pick_tt(T, V, Cin, Cout, vmem_budget_bytes=4 * 1024 * 1024):
    """Largest divisor of T whose (x + g + out) block fits the VMEM budget.

    Budget is per single buffer set; Pallas double-buffers, so ~2x this stays
    far below the smallest scoped-VMEM default across v5e/v6e/v7x.
    """
    best = 1
    for tt in range(1, T + 1):
        if T % tt:
            continue
        blk_bytes = tt * V * (2 * Cin      # x  (bf16)
                              + 2 * V      # g  (bf16)
                              + 4 * Cout)  # out (f32)
        if blk_bytes <= vmem_budget_bytes:
            best = tt
    return best


def gcn_spatial_ntvc(x_ntvc, g, w1_oihw, w2_oihw, b1, b2,
                     gamma, beta, running_mean, running_var,
                     eps=1e-5, compute_dtype=jnp.bfloat16):
    """Transpose-free entry point.

    x_ntvc: (N, T, V, Cin) channels-last; g: (N, T, V, V).
    Returns (N, T, V, Cout) in float32.
    """
    N, T, V, Cin = x_ntvc.shape
    Cout = w1_oihw.shape[0]

    # --- fold conv biases + BatchNorm (inference) into weights / one shift ---
    f32 = jnp.float32
    inv_std = jax.lax.rsqrt(running_var.astype(f32) + eps)
    s = gamma.astype(f32) * inv_std                                  # (Cout,)
    w1 = jnp.transpose(w1_oihw.reshape(Cout, Cin)).astype(f32)       # (Cin, Cout)
    w2 = jnp.transpose(w2_oihw.reshape(Cout, Cin)).astype(f32)       # (Cin, Cout)
    w = jnp.concatenate([w1, w2], axis=0) * s[None, :]               # (2Cin, Cout)
    shift = ((b1 + b2).astype(f32) * s
             + beta.astype(f32)
             - running_mean.astype(f32) * s).reshape(1, Cout)        # (1, Cout)

    TT = _pick_tt(T, V, Cin, Cout)

    xk = x_ntvc.astype(compute_dtype)
    gk = g.astype(compute_dtype)
    wk = w.astype(compute_dtype)

    out = pl.pallas_call(
        _gcn_spatial_kernel,
        out_shape=jax.ShapeDtypeStruct((N, T, V, Cout), jnp.float32),
        grid_spec=pltpu.PrefetchScalarGridSpec(
            num_scalar_prefetch=0,
            grid=(N, T // TT),
            in_specs=[
                pl.BlockSpec((pl.Squeezed(), TT, V, Cin),
                             lambda n, tb: (n, tb, 0, 0)),
                pl.BlockSpec((pl.Squeezed(), TT, V, V),
                             lambda n, tb: (n, tb, 0, 0)),
                pl.BlockSpec((2 * Cin, Cout), lambda n, tb: (0, 0)),
                pl.BlockSpec((1, Cout), lambda n, tb: (0, 0)),
            ],
            out_specs=pl.BlockSpec((pl.Squeezed(), TT, V, Cout),
                                   lambda n, tb: (n, tb, 0, 0)),
        ),
        compiler_params=pltpu.CompilerParams(
            dimension_semantics=("parallel", "parallel")),
    )(xk, gk, wk, shift)
    return out


def gcn_spatial(x_nchw, g, w1_oihw, w2_oihw, b1, b2,
                gamma, beta, running_mean, running_var,
                eps=1e-5, compute_dtype=jnp.bfloat16):
    """PyTorch-parity interface: x in NCHW = (N, Cin, V, T); g: (N, T, V, V).

    Returns (N, Cout, V, T).  The two transposes here are interface glue only;
    an NTVC end-to-end model should call gcn_spatial_ntvc directly and skip
    them (they are full-tensor HBM round trips).
    """
    x_ntvc = jnp.transpose(x_nchw, (0, 3, 2, 1))                     # (N,T,V,Cin)
    out_ntvc = gcn_spatial_ntvc(x_ntvc, g, w1_oihw, w2_oihw, b1, b2,
                                gamma, beta, running_mean, running_var,
                                eps=eps, compute_dtype=compute_dtype)
    return jnp.transpose(out_ntvc, (0, 3, 2, 1))                     # (N,Cout,V,T)


def _reference(x_nchw, g, w1_oihw, w2_oihw, b1, b2,
               gamma, beta, running_mean, running_var, eps=1e-5):
    """Pure-JAX f32 mirror of the PyTorch forward (for validation)."""
    N, Cin, V, T = x_nchw.shape
    Cout = w1_oihw.shape[0]
    x1 = jnp.transpose(x_nchw, (0, 3, 2, 1))                 # (N, T, V, Cin)
    x1 = jnp.einsum('ntuv,ntvc->ntuc', g, x1)                # g.matmul(x1)
    x1 = jnp.transpose(x1, (0, 3, 2, 1))                     # (N, Cin, V, T)

    def conv1x1(inp, w, b):
        y = jnp.einsum('oc,nchw->nohw', w.reshape(Cout, Cin), inp)
        return y + b.reshape(1, Cout, 1, 1)

    y = conv1x1(x1, w1_oihw, b1) + conv1x1(x_nchw, w2_oihw, b2)
    inv_std = 1.0 / jnp.sqrt(running_var + eps)
    y = (y - running_mean.reshape(1, Cout, 1, 1)) * (gamma * inv_std).reshape(1, Cout, 1, 1) \
        + beta.reshape(1, Cout, 1, 1)
    return jnp.maximum(y, 0.0)


if __name__ == "__main__":
    key = jax.random.PRNGKey(0)
    ks = jax.random.split(key, 10)

    N, Cin, Cout, V, T = 2, 4, 8, 16, 8

    x = jax.random.normal(ks[0], (N, Cin, V, T), dtype=jnp.float32)   # NCHW
    g_logits = jax.random.normal(ks[1], (N, T, V, V), dtype=jnp.float32)
    g = jax.nn.softmax(g_logits, axis=-1)                             # adjacency

    # Conv2d weights (Cout, Cin, 1, 1) + biases, deterministic
    w1 = jax.random.normal(ks[2], (Cout, Cin, 1, 1), dtype=jnp.float32) * 0.1
    w2 = jax.random.normal(ks[3], (Cout, Cin, 1, 1), dtype=jnp.float32) * 0.1
    b1 = jax.random.normal(ks[4], (Cout,), dtype=jnp.float32) * 0.05
    b2 = jax.random.normal(ks[5], (Cout,), dtype=jnp.float32) * 0.05

    # BatchNorm2d parameters (inference-mode running stats)
    gamma = 1.0 + 0.1 * jax.random.normal(ks[6], (Cout,), dtype=jnp.float32)
    beta = 0.1 * jax.random.normal(ks[7], (Cout,), dtype=jnp.float32)
    running_mean = 0.1 * jax.random.normal(ks[8], (Cout,), dtype=jnp.float32)
    running_var = 1.0 + 0.1 * jax.nn.softplus(
        jax.random.normal(ks[9], (Cout,), dtype=jnp.float32))

    ref = _reference(x, g, w1, w2, b1, b2, gamma, beta, running_mean, running_var)

    # 1) f32 compute path: exact-semantics check (tight tolerance).
    out_f32 = gcn_spatial(x, g, w1, w2, b1, b2, gamma, beta,
                          running_mean, running_var,
                          compute_dtype=jnp.float32)
    out_f32 = jax.block_until_ready(out_f32)
    assert out_f32.shape == (N, Cout, V, T)
    assert jnp.allclose(out_f32, ref, atol=1e-4, rtol=1e-4), \
        "f32 kernel mismatch vs JAX reference"

    # 2) bf16 fast path (default): halves HBM traffic / doubles MXU throughput;
    #    f32 accumulation keeps the error small but the tolerance is relaxed.
    out_bf16 = gcn_spatial(x, g, w1, w2, b1, b2, gamma, beta,
                           running_mean, running_var,
                           compute_dtype=jnp.bfloat16)
    out_bf16 = jax.block_until_ready(out_bf16)
    assert out_bf16.shape == (N, Cout, V, T)
    max_err = float(jnp.max(jnp.abs(out_bf16 - ref)))
    assert max_err < 5e-2, f"bf16 kernel mismatch vs JAX reference (max_err={max_err})"

    print("KERNEL_OK")
</pallas_src>

<mosaic_0001>
module attributes {stable_mosaic.version = 11 : i64} {
  func.func @_gcn_spatial_kernel(%arg0: i32, %arg1: i32, %arg2: memref<1x8x16x4xf32, #tpu.memory_space<vmem>>, %arg3: memref<1x8x16x16xf32, #tpu.memory_space<vmem>>, %arg4: memref<8x8xf32, #tpu.memory_space<vmem>>, %arg5: memref<1x8xf32, #tpu.memory_space<vmem>>, %arg6: memref<1x8x16x8xf32, #tpu.memory_space<vmem>>) attributes {dimension_semantics = [#tpu.dimension_semantics<parallel>, #tpu.dimension_semantics<parallel>], iteration_bounds = array<i64: 2, 1>, scalar_prefetch = 0 : i64, scratch_operands = 0 : i64, tpu.core_type = #tpu.core_type<tc>, window_params = [{transform_indices = @transform_0, window_bounds = array<i64: 1, 8, 16, 4>}, {transform_indices = @transform_1, window_bounds = array<i64: 1, 8, 16, 16>}, {pipeline_mode = #tpu.pipeline_mode<synchronous>, transform_indices = @transform_2, window_bounds = array<i64: 8, 8>}, {pipeline_mode = #tpu.pipeline_mode<synchronous>, transform_indices = @transform_3, window_bounds = array<i64: 1, 8>}, {transform_indices = @transform_4, window_bounds = array<i64: 1, 8, 16, 8>}]} {
    %c0 = arith.constant 0 : index
    %c0_0 = arith.constant 0 : index
    %c0_1 = arith.constant 0 : index
    %c0_2 = arith.constant 0 : index
    %0 = vector.load %arg2[%c0, %c0_0, %c0_1, %c0_2] : memref<1x8x16x4xf32, #tpu.memory_space<vmem>>, vector<1x8x16x4xf32>
    %1 = vector.shape_cast %0 : vector<1x8x16x4xf32> to vector<8x16x4xf32>
    %c0_3 = arith.constant 0 : index
    %c0_4 = arith.constant 0 : index
    %c0_5 = arith.constant 0 : index
    %c0_6 = arith.constant 0 : index
    %2 = vector.load %arg3[%c0_3, %c0_4, %c0_5, %c0_6] : memref<1x8x16x16xf32, #tpu.memory_space<vmem>>, vector<1x8x16x16xf32>
    %3 = vector.shape_cast %2 : vector<1x8x16x16xf32> to vector<8x16x16xf32>
    "tpu.trace_start"() <{level = 10 : i32, message = "tuv,tvc->tuc"}> : () -> ()
    %cst = arith.constant dense<0.000000e+00> : vector<8x16x4xf32>
    %4 = tpu.matmul %3, %1, %cst {dimension_numbers = #tpu.dot_dimension_numbers<[2], [1], [1], [2], [0, 0, 0, 1, 1, 2], [0], [0]>} : vector<8x16x16xf32>, vector<8x16x4xf32>, vector<8x16x4xf32> -> vector<8x16x4xf32>
    "tpu.trace_stop"() : () -> ()
    %5 = vector.shape_cast %4 : vector<8x16x4xf32> to vector<128x4xf32>
    %6 = vector.shape_cast %1 : vector<8x16x4xf32> to vector<128x4xf32>
    %7 = tpu.concatenate %5, %6 in 1 : vector<128x4xf32>, vector<128x4xf32> -> vector<128x8xf32>
    %c0_7 = arith.constant 0 : index
    %c0_8 = arith.constant 0 : index
    %8 = vector.load %arg4[%c0_7, %c0_8] : memref<8x8xf32, #tpu.memory_space<vmem>>, vector<8x8xf32>
    %cst_9 = arith.constant dense<0.000000e+00> : vector<128x8xf32>
    %9 = tpu.matmul %7, %8, %cst_9 {dimension_numbers = #tpu.dot_dimension_numbers<[1], [0], [0], [1], [0, 0, 1, 1], [], []>} : vector<128x8xf32>, vector<8x8xf32>, vector<128x8xf32> -> vector<128x8xf32>
    %c0_10 = arith.constant 0 : index
    %c0_11 = arith.constant 0 : index
    %10 = vector.load %arg5[%c0_10, %c0_11] : memref<1x8xf32, #tpu.memory_space<vmem>>, vector<1x8xf32>
    %11 = vector.broadcast %10 : vector<1x8xf32> to vector<128x8xf32>
    %12 = arith.addf %9, %11 : vector<128x8xf32>
    %cst_12 = arith.constant 0.000000e+00 : f32
    %13 = vector.broadcast %cst_12 : f32 to vector<128x8xf32>
    %14 = arith.maximumf %12, %13 : vector<128x8xf32>
    %15 = vector.shape_cast %14 : vector<128x8xf32> to vector<8x16x8xf32>
    %c0_13 = arith.constant 0 : index
    %c0_14 = arith.constant 0 : index
    %c0_15 = arith.constant 0 : index
    %c0_16 = arith.constant 0 : index
    %16 = vector.load %arg6[%c0_13, %c0_14, %c0_15, %c0_16] : memref<1x8x16x8xf32, #tpu.memory_space<vmem>>, vector<1x8x16x8xf32>
    %17 = vector.shape_cast %16 : vector<1x8x16x8xf32> to vector<8x16x8xf32>
    %18 = vector.shape_cast %15 : vector<8x16x8xf32> to vector<1x8x16x8xf32>
    tpu.vector_store %arg6[%c0_13, %c0_14, %c0_15, %c0_16], %18 {strides = array<i32>} : memref<1x8x16x8xf32, #tpu.memory_space<vmem>>, vector<1x8x16x8xf32>,
    return
  }
  func.func @transform_0(%arg0: i32, %arg1: i32) -> (i32, i32, i32, i32) {
    %c0_i32 = arith.constant 0 : i32
    %c0_i32_0 = arith.constant 0 : i32
    %c0_i32_1 = arith.constant 0 : i32
    return %arg0, %arg1, %c0_i32, %c0_i32_0 : i32, i32, i32, i32
  }
  func.func @transform_1(%arg0: i32, %arg1: i32) -> (i32, i32, i32, i32) {
    %c0_i32 = arith.constant 0 : i32
    %c0_i32_0 = arith.constant 0 : i32
    %c0_i32_1 = arith.constant 0 : i32
    return %arg0, %arg1, %c0_i32, %c0_i32_0 : i32, i32, i32, i32
  }
  func.func @transform_2(%arg0: i32, %arg1: i32) -> (i32, i32) {
    %c0_i32 = arith.constant 0 : i32
    %c0_i32_0 = arith.constant 0 : i32
    %c0_i32_1 = arith.constant 0 : i32
    return %c0_i32, %c0_i32_0 : i32, i32
  }
  func.func @transform_3(%arg0: i32, %arg1: i32) -> (i32, i32) {
    %c0_i32 = arith.constant 0 : i32
    %c0_i32_0 = arith.constant 0 : i32
    %c0_i32_1 = arith.constant 0 : i32
    return %c0_i32, %c0_i32_0 : i32, i32
  }
  func.func @transform_4(%arg0: i32, %arg1: i32) -> (i32, i32, i32, i32) {
    %c0_i32 = arith.constant 0 : i32
    %c0_i32_0 = arith.constant 0 : i32
    %c0_i32_1 = arith.constant 0 : i32
    return %arg0, %arg1, %c0_i32, %c0_i32_0 : i32, i32, i32, i32
  }
}

</mosaic_0001>

<llo_original>
// kernel: tpu_custom_call.1
$region0: #{tpu_custom_call.1}
  #allocation0 [shape = 'u32[]', space=smem, size = 0x4, offset = 0x4, fixed_abs, tag = 'smem constant byte address 0x4 - core index']
  #allocation1 [shape = 'u32[144,128]{1,0:T(1,128)}', space=vmem, size = 0x12000, scoped, tag = 'internal scratch']
  %s0 = inlined_call_operand.vmem [shape: f32[2,8,16,4], index: 0, kind: input, shape index: {}]
  %s1 = inlined_call_operand.vmem [shape: f32[2,8,16,16], index: 1, kind: input, shape index: {}]
  %s2 = inlined_call_operand.vmem [shape: f32[8,8], index: 2, kind: input, shape index: {}]
  %s3 = inlined_call_operand.vmem [shape: f32[1,8], index: 3, kind: input, shape index: {}]
  %s4 = inlined_call_operand.vmem [shape: f32[2,8,16,8], index: 4, kind: output, shape index: {}]
  %s5 = sld [smem:[#allocation0]]
  $region49: #{tpu_custom_call.1} parent=0
    _
  %s7 = ssub.s32 1, %s5
  %s8 = scalar_select 0, %s7, %s5
  loop: start=0, step=1, limit=4
  $region2: #{tpu_custom_call.1} parent=0 // loop_pre_header
    _
  $region3: #{tpu_custom_call.1} parent=0 // loop_header
    %s10 = sphi 0, %s14
    %p11 = scmp.ge.s32.totalorder %s10, 4
    %s17 = sphi 0, %s29
    %s18 = sphi 0, %s25
    %s19 = sphi 0, %s17
    %s20 = sphi 0, %s18
    %s21 = sphi 0, %s19
    %s22 = sphi 0, %s20
    %s34 = sphi 0, %s36
    %s37 = sphi 0, %s34
    %s38 = sphi 0, %s37
    %s54 = sphi 0, %s38
    %s62 = sphi 0, %s64
    %s65 = sphi 0, %s62
    %s66 = sphi 0, %s65
    %s82 = sphi 0, %s66
    %s86 = sphi 0, %s86
    %s88 = sphi 0, %s86
    %s89 = sphi 0, %s88
    %s103 = sphi 0, %s89
    %s107 = sphi 0, %s107
    %s109 = sphi 0, %s107
    %s110 = sphi 0, %s109
    %s124 = sphi 0, %s110
    %s132 = sphi 0, %s134
    %s135 = sphi 0, %s132
    %s136 = sphi 0, %s135
    %s152 = sphi 0, %s136
  $region4: #{tpu_custom_call.1} parent=0 // loop_header_branch
    %13 = sbr.rel (%p11) target = $region8
  $region5: #{tpu_custom_call.1} parent=0 // loop_body
    %s15 = ssub.s32 %s10, 1
    %s16 = ssub.s32 %s10, 2
    %s23 = sadd.s32 1, %s18
    %p24 = scmp.ge.s32.totalorder %s23, 1
    %s25 = scalar_select %p24, 0, %s23
    %s26 = sadd.s32 1, %s17
    %s27 = scalar_select %p24, %s26, %s17
    %p28 = scmp.ge.s32.totalorder %s27, 2
    %s29 = scalar_select %p28, 0, %s27
    %s30 = ssub.s32 %s17, %s29
    %s31 = ssub.s32 %s18, %s25
    %s32 = sor.u32 %s30, %s31
    %p33 = scmp.eq.s32.totalorder %s32, 0
    %s35 = sadd.s32 %s34, 1
    %s36 = scalar_select %p33, %s34, %s35
    %p39 = pneg %p33
    %p40 = scmp.eq.s32.totalorder %s10, 1
    %p41 = por %p39, %p40
    %p42 = scmp.ne.s32.totalorder %s34, %s37
    %p43 = scmp.eq.s32.totalorder %s10, 0
    %p44 = por %p42, %p43
    %p45 = scmp.ne.s32.totalorder %s34, %s37
    %p46 = scmp.eq.s32.totalorder %s15, 1
    %p47 = por %p45, %p46
    %p48 = scmp.ne.s32.totalorder %s37, %s38
    %p49 = scmp.eq.s32.totalorder %s15, 0
    %p50 = por %p48, %p49
    %p51 = scmp.ne.s32.totalorder %s37, %s38
    %p52 = scmp.eq.s32.totalorder %s16, 1
    %p53 = por %p51, %p52
    %p55 = scmp.ne.s32.totalorder %s38, %s54
    %p56 = scmp.eq.s32.totalorder %s16, 0
    %p57 = por %p55, %p56
    %s58 = ssub.s32 %s17, %s29
    %s59 = ssub.s32 %s18, %s25
    %s60 = sor.u32 %s58, %s59
    %p61 = scmp.eq.s32.totalorder %s60, 0
    %s63 = sadd.s32 %s62, 1
    %s64 = scalar_select %p61, %s62, %s63
    %p67 = pneg %p61
    %p68 = scmp.eq.s32.totalorder %s10, 1
    %p69 = por %p67, %p68
    %p70 = scmp.ne.s32.totalorder %s62, %s65
    %p71 = scmp.eq.s32.totalorder %s10, 0
    %p72 = por %p70, %p71
    %p73 = scmp.ne.s32.totalorder %s62, %s65
    %p74 = scmp.eq.s32.totalorder %s15, 1
    %p75 = por %p73, %p74
    %p76 = scmp.ne.s32.totalorder %s65, %s66
    %p77 = scmp.eq.s32.totalorder %s15, 0
    %p78 = por %p76, %p77
    %p79 = scmp.ne.s32.totalorder %s65, %s66
    %p80 = scmp.eq.s32.totalorder %s16, 1
    %p81 = por %p79, %p80
    %p83 = scmp.ne.s32.totalorder %s66, %s82
    %p84 = scmp.eq.s32.totalorder %s16, 0
    %p85 = por %p83, %p84
    %s87 = sadd.s32 %s86, 1
    %p90 = scmp.eq.s32.totalorder %s10, 1
    %p91 = scmp.ne.s32.totalorder %s86, %s88
    %p92 = scmp.eq.s32.totalorder %s10, 0
    %p93 = por %p91, %p92
    %p94 = scmp.ne.s32.totalorder %s86, %s88
    %p95 = scmp.eq.s32.totalorder %s15, 1
    %p96 = por %p94, %p95
    %p97 = scmp.ne.s32.totalorder %s88, %s89
    %p98 = scmp.eq.s32.totalorder %s15, 0
    %p99 = por %p97, %p98
    %p100 = scmp.ne.s32.totalorder %s88, %s89
    %p101 = scmp.eq.s32.totalorder %s16, 1
    %p102 = por %p100, %p101
    %p104 = scmp.ne.s32.totalorder %s89, %s103
    %p105 = scmp.eq.s32.totalorder %s16, 0
    %p106 = por %p104, %p105
    %s108 = sadd.s32 %s107, 1
    %p111 = scmp.eq.s32.totalorder %s10, 1
    %p112 = scmp.ne.s32.totalorder %s107, %s109
    %p113 = scmp.eq.s32.totalorder %s10, 0
    %p114 = por %p112, %p113
    %p115 = scmp.ne.s32.totalorder %s107, %s109
    %p116 = scmp.eq.s32.totalorder %s15, 1
    %p117 = por %p115, %p116
    %p118 = scmp.ne.s32.totalorder %s109, %s110
    %p119 = scmp.eq.s32.totalorder %s15, 0
    %p120 = por %p118, %p119
    %p121 = scmp.ne.s32.totalorder %s109, %s110
    %p122 = scmp.eq.s32.totalorder %s16, 1
    %p123 = por %p121, %p122
    %p125 = scmp.ne.s32.totalorder %s110, %s124
    %p126 = scmp.eq.s32.totalorder %s16, 0
    %p127 = por %p125, %p126
    %s128 = ssub.s32 %s17, %s29
    %s129 = ssub.s32 %s18, %s25
    %s130 = sor.u32 %s128, %s129
    %p131 = scmp.eq.s32.totalorder %s130, 0
    %s133 = sadd.s32 %s132, 1
    %s134 = scalar_select %p131, %s132, %s133
    %p137 = pneg %p131
    %p138 = scmp.eq.s32.totalorder %s10, 1
    %p139 = por %p137, %p138
    %p140 = scmp.ne.s32.totalorder %s132, %s135
    %p141 = scmp.eq.s32.totalorder %s10, 0
    %p142 = por %p140, %p141
    %p143 = scmp.ne.s32.totalorder %s132, %s135
    %p144 = scmp.eq.s32.totalorder %s15, 1
    %p145 = por %p143, %p144
    %p146 = scmp.ne.s32.totalorder %s135, %s136
    %p147 = scmp.eq.s32.totalorder %s15, 0
    %p148 = por %p146, %p147
    %p149 = scmp.ne.s32.totalorder %s135, %s136
    %p150 = scmp.eq.s32.totalorder %s16, 1
    %p151 = por %p149, %p150
    %p153 = scmp.ne.s32.totalorder %s136, %s152
    %p154 = scmp.eq.s32.totalorder %s16, 0
    %p155 = por %p153, %p154
    %p156 = scmp.le.s32.totalorder 1, %s10
    %p157 = scmp.lt.s32.totalorder %s10, 3
    %p158 = pnand %p156, %p157
    %p159 = pneg %p158
    // Predicated region
    $region9: #{tpu_custom_call.1} parent=5 // pred_check
      _
    $region10: #{tpu_custom_call.1} parent=5 // pred_check_branch
      %161 = sbr.rel (%p158) target = $region12
    $region11: #{tpu_custom_call.1} parent=5 // pred_region
      %s162 = ssub.s32 %s10, 1
      // Predicated region
      $region13: #{tpu_custom_call.1} parent=11 // pred_check
        %p163 = pneg %p99
      $region14: #{tpu_custom_call.1} parent=11 // pred_check_branch
        %165 = sbr.rel (%p163) target = $region16
      $region15: #{tpu_custom_call.1} parent=11 // pred_region
        _
      $region16: #{tpu_custom_call.1} parent=11 // pred_fallthru
        _
      // Predicated region
      $region17: #{tpu_custom_call.1} parent=11 // pred_check
        %p166 = pneg %p120
      $region18: #{tpu_custom_call.1} parent=11 // pred_check_branch
        %168 = sbr.rel (%p166) target = $region20
      $region19: #{tpu_custom_call.1} parent=11 // pred_region
        _
      $region20: #{tpu_custom_call.1} parent=11 // pred_fallthru
        _
    $region12: #{tpu_custom_call.1} parent=5 // pred_fallthru
      _
    %p169 = scmp.lt.s32.totalorder %s10, 2
    // Predicated region
    $region21: #{tpu_custom_call.1} parent=5 // pred_check
      %p170 = pneg %p169
    $region22: #{tpu_custom_call.1} parent=5 // pred_check_branch
      %172 = sbr.rel (%p170) target = $region24
    $region23: #{tpu_custom_call.1} parent=5 // pred_region
      // Predicated region
      $region25: #{tpu_custom_call.1} parent=23 // pred_check
        %p173 = pneg %p44
      $region26: #{tpu_custom_call.1} parent=23 // pred_check_branch
        %175 = sbr.rel (%p173) target = $region28
      $region27: #{tpu_custom_call.1} parent=23 // pred_region
        %s176 = smul.u32 8, %s18
        %p177 = scmp.lt.s32.totalorder %s17, 1
        %s178 = scalar_select %p177, %s17, 1
        %p179 = scmp.lt.s32.totalorder %s176, 7
        %s180 = scalar_select %p179, %s176, 7
        %s181 = smul.addr %s180, 2
        %s182 = smul.addr %s178, 16
        %s183 = sadd.s32 %s181, %s182
        %s184 = smul.addr %s183, 8
        %s185 = scalar_lea.vmem %s0, %s184
        %s186 = smul.u32 8, %s18
      $region28: #{tpu_custom_call.1} parent=23 // pred_fallthru
        _
      // Predicated region
      $region29: #{tpu_custom_call.1} parent=23 // pred_check
        %p187 = pneg %p72
      $region30: #{tpu_custom_call.1} parent=23 // pred_check_branch
        %189 = sbr.rel (%p187) target = $region32
      $region31: #{tpu_custom_call.1} parent=23 // pred_region
        %s190 = smul.u32 8, %s18
        %p191 = scmp.lt.s32.totalorder %s17, 1
        %s192 = scalar_select %p191, %s17, 1
        %p193 = scmp.lt.s32.totalorder %s190, 7
        %s194 = scalar_select %p193, %s190, 7
        %s195 = smul.addr %s194, 2
        %s196 = smul.addr %s192, 16
        %s197 = sadd.s32 %s195, %s196
        %s198 = smul.addr %s197, 8
        %s199 = scalar_lea.vmem %s1, %s198
        %s200 = smul.u32 8, %s18
      $region32: #{tpu_custom_call.1} parent=23 // pred_fallthru
        _
    $region24: #{tpu_custom_call.1} parent=5 // pred_fallthru
      _
    %p201 = scmp.le.s32.totalorder 1, %s10
    %p202 = scmp.lt.s32.totalorder %s10, 3
    %p203 = pnand %p201, %p202
    %p204 = pneg %p203
    // Predicated region
    $region33: #{tpu_custom_call.1} parent=5 // pred_check
      _
    $region34: #{tpu_custom_call.1} parent=5 // pred_check_branch
      %206 = sbr.rel (%p203) target = $region36
    $region35: #{tpu_custom_call.1} parent=5 // pred_region
      %s207 = ssub.s32 %s10, 1
      %s208 = smul.u32 8, %s20
      %p209 = scmp.lt.s32.totalorder %s19, 1
      %s210 = scalar_select %p209, %s19, 1
      %p211 = scmp.lt.s32.totalorder %s208, 7
      %s212 = scalar_select %p211, %s208, 7
      %s213 = smul.addr %s212, 2
      %s214 = smul.addr %s210, 16
      %s215 = sadd.s32 %s213, %s214
      %s216 = smul.addr %s215, 8
      %s217 = scalar_lea.vmem %s0, %s216
      %p218 = pneg %p50
      %p219 = pneg %p47
      %s220 = smul.u32 8, %s20
      %p221 = scmp.lt.s32.totalorder %s19, 1
      %s222 = scalar_select %p221, %s19, 1
      %p223 = scmp.lt.s32.totalorder %s220, 7
      %s224 = scalar_select %p223, %s220, 7
      %s225 = smul.addr %s224, 2
      %s226 = smul.addr %s222, 16
      %s227 = sadd.s32 %s225, %s226
      %s228 = smul.addr %s227, 8
      %s229 = scalar_lea.vmem %s1, %s228
      %p230 = pneg %p78
      %p231 = pneg %p75
      %p232 = pneg %p99
      %p233 = pneg %p96
      %p234 = pneg %p120
      %p235 = pneg %p117
      %p236 = pneg %p148
      %p237 = pneg %p145
      %s238 = smul.u32 8, %s20
      %p239 = scmp.lt.s32.totalorder %s19, 1
      %s240 = scalar_select %p239, %s19, 1
      %p241 = scmp.lt.s32.totalorder %s238, 7
      %s242 = scalar_select %p241, %s238, 7
      %s243 = smul.addr %s242, 2
      %s244 = smul.addr %s240, 16
      %s245 = sadd.s32 %s243, %s244
      %s246 = smul.addr %s245, 8
      %s247 = scalar_lea.vmem %s4, %s246
      %s248 = smul.u32 8, %s20
      %p249 = scmp.lt.s32.totalorder %s19, 1
      %s250 = scalar_select %p249, %s19, 1
      %p251 = scmp.lt.s32.totalorder %s248, 7
      %s252 = scalar_select %p251, %s248, 7
      %s253 = smul.addr %s252, 2
      %s254 = smul.addr %s250, 16
      %s255 = sadd.s32 %s253, %s254
      %s256 = smul.addr %s255, 8
      %s257 = scalar_lea.vmem %s0, %s256
      %s258 = smul.u32 8, %s20
      %s259 = smul.u32 8, %s20
      %p260 = scmp.lt.s32.totalorder %s19, 1
      %s261 = scalar_select %p260, %s19, 1
      %p262 = scmp.lt.s32.totalorder %s259, 7
      %s263 = scalar_select %p262, %s259, 7
      %s264 = smul.addr %s263, 2
      %s265 = smul.addr %s261, 16
      %s266 = sadd.s32 %s264, %s265
      %s267 = smul.addr %s266, 8
      %s268 = scalar_lea.vmem %s1, %s267
      %s269 = smul.u32 8, %s20
      %s270 = smul.u32 8, %s20
      %p271 = scmp.lt.s32.totalorder %s19, 1
      %s272 = scalar_select %p271, %s19, 1
      %p273 = scmp.lt.s32.totalorder %s270, 7
      %s274 = scalar_select %p273, %s270, 7
      %s275 = smul.addr %s274, 2
      %s276 = smul.addr %s272, 16
      %s277 = sadd.s32 %s275, %s276
      %s278 = smul.addr %s277, 8
      %s279 = scalar_lea.vmem %s4, %s278
      %s280 = smul.u32 8, %s20
      %v281 = vld [vmem:[%s257] sm:$0xff]
      %v282 = vld [vmem:[%s257 + $0x8] sm:$0xff]
      %v283 = vld [vmem:[%s257 + $0x10] sm:$0xff]
      %v284 = vld [vmem:[%s257 + $0x18] sm:$0xff]
      %v285 = vld [vmem:[%s257 + $0x20] sm:$0xff]
      %v286 = vld [vmem:[%s257 + $0x28] sm:$0xff]
      %v287 = vld [vmem:[%s257 + $0x30] sm:$0xff]
      %v288 = vld [vmem:[%s257 + $0x38] sm:$0xff]
      %v289 = vld [vmem:[%s257 + $0x40] sm:$0xff]
      %v290 = vld [vmem:[%s257 + $0x48] sm:$0xff]
      %v291 = vld [vmem:[%s257 + $0x50] sm:$0xff]
      %v292 = vld [vmem:[%s257 + $0x58] sm:$0xff]
      %v293 = vld [vmem:[%s257 + $0x60] sm:$0xff]
      %v294 = vld [vmem:[%s257 + $0x68] sm:$0xff]
      %v295 = vld [vmem:[%s257 + $0x70] sm:$0xff]
      %v296 = vld [vmem:[%s257 + $0x78] sm:$0xff]
      %v297 = vld [vmem:[%s268] sm:$0xff]
      %v298 = vld [vmem:[%s268 + $0x8] sm:$0xff]
      %v299 = vld [vmem:[%s268 + $0x10] sm:$0xff]
      %v300 = vld [vmem:[%s268 + $0x18] sm:$0xff]
      %v301 = vld [vmem:[%s268 + $0x20] sm:$0xff]
      %v302 = vld [vmem:[%s268 + $0x28] sm:$0xff]
      %v303 = vld [vmem:[%s268 + $0x30] sm:$0xff]
      %v304 = vld [vmem:[%s268 + $0x38] sm:$0xff]
      %v305 = vld [vmem:[%s268 + $0x40] sm:$0xff]
      %v306 = vld [vmem:[%s268 + $0x48] sm:$0xff]
      %v307 = vld [vmem:[%s268 + $0x50] sm:$0xff]
      %v308 = vld [vmem:[%s268 + $0x58] sm:$0xff]
      %v309 = vld [vmem:[%s268 + $0x60] sm:$0xff]
      %v310 = vld [vmem:[%s268 + $0x68] sm:$0xff]
      %v311 = vld [vmem:[%s268 + $0x70] sm:$0xff]
      %v312 = vld [vmem:[%s268 + $0x78] sm:$0xff]
      %vm313 = vcmask 130048
      %v315 = vsel %vm313, %v297, 0
      %v318 = vsel %vm313, %v298, 0
      %320 = vmatprep.subr.mxu0 0.0
      %321 = vmatpush1.msra.mxu0 %v281
      %322 = vmatprep.subr.mxu0 0.0
      %323 = vmatpush1.msra.mxu0 %v282
      %324 = vmatprep.subr.mxu0 0.0
      %325 = vmatpush1.msra.mxu0 0.0
      %326 = vmatprep.subr.mxu0 0.0
      %327 = vmatpush1.msra.mxu0 0.0
      %328 = vmatprep.subr.mxu0 0.0
      %329 = vmatpush1.msra.mxu0 0.0
      %330 = vmatprep.subr.mxu0 0.0
      %331 = vmatpush1.msra.mxu0 0.0
      %332 = vmatprep.subr.mxu0 0.0
      %333 = vmatpush1.msra.mxu0 0.0
      %334 = vmatprep.subr.mxu0 0.0
      %335 = vmatpush1.msra.mxu0 0.0
      %336 = vmatprep.subr.mxu0 0.0
      %337 = vmatpush1.msra.mxu0 0.0
      %338 = vmatprep.subr.mxu0 0.0
      %339 = vmatpush1.msra.mxu0 0.0
      %340 = vmatprep.subr.mxu0 0.0
      %341 = vmatpush1.msra.mxu0 0.0
      %342 = vmatprep.subr.mxu0 0.0
      %343 = vmatpush1.msra.mxu0 0.0
      %344 = vmatprep.subr.mxu0 0.0
      %345 = vmatpush1.msra.mxu0 0.0
      %346 = vmatprep.subr.mxu0 0.0
      %347 = vmatpush1.msra.mxu0 0.0
      %348 = vmatprep.subr.mxu0 0.0
      %349 = vmatpush1.msra.mxu0 0.0
      %350 = vmatprep.subr.mxu0 0.0
      %351 = vmatpush1.msra.mxu0 0.0
      %352 = vmatprep.subr.mxu0 0.0
      %353 = vmatpush1.msra.mxu0 0.0
      %354 = vmatprep.subr.mxu0 0.0
      %355 = vmatpush1.msra.mxu0 0.0
      %356 = vmatprep.subr.mxu0 0.0
      %357 = vmatpush1.msra.mxu0 0.0
      %358 = vmatprep.subr.mxu0 0.0
      %359 = vmatpush1.msra.mxu0 0.0
      %360 = vmatprep.subr.mxu0 0.0
      %361 = vmatpush1.msra.mxu0 0.0
      %362 = vmatprep.subr.mxu0 0.0
      %363 = vmatpush1.msra.mxu0 0.0
      %364 = vmatprep.subr.mxu0 0.0
      %365 = vmatpush1.msra.mxu0 0.0
      %366 = vmatprep.subr.mxu0 0.0
      %367 = vmatpush1.msra.mxu0 0.0
      %368 = vmatprep.subr.mxu0 0.0
      %369 = vmatpush1.msra.mxu0 0.0
      %370 = vmatprep.subr.mxu0 0.0
      %371 = vmatpush1.msra.mxu0 0.0
      %372 = vmatprep.subr.mxu0 0.0
      %373 = vmatpush1.msra.mxu0 0.0
      %374 = vmatprep.subr.mxu0 0.0
      %375 = vmatpush1.msra.mxu0 0.0
      %376 = vmatprep.subr.mxu0 0.0
      %377 = vmatpush1.msra.mxu0 0.0
      %378 = vmatprep.subr.mxu0 0.0
      %379 = vmatpush1.msra.mxu0 0.0
      %380 = vmatprep.subr.mxu0 0.0
      %381 = vmatpush1.msra.mxu0 0.0
      %382 = vmatprep.subr.mxu0 0.0
      %383 = vmatpush1.msra.mxu0 0.0
      %384 = vmatprep.mubr.f32.mxu0 0.0
      %385 = vmatmul.mubr.f32.gmra.mrb[0].mxu0 %v315
      %v386 = vpop.f32.mrb[0].mxu0
      %v387 = vadd.f32 0.0, %v386
      %v388 = vpop.f32.mrb[0].mxu0
      %389 = vmatprep.mubr.f32.mxu0 0.0
      %390 = vmatmul.mubr.f32.gmra.mrb[0].mxu0 %v318
      %v391 = vpop.f32.mrb[0].mxu0
      %v392 = vadd.f32 0.0, %v391
      %v393 = vpop.f32.mrb[0].mxu0
      %394 = vdwg.mxu0
      %v396 = vsel %vm313, %v299, 0
      %v399 = vsel %vm313, %v300, 0
      %401 = vmatprep.subr.mxu0 0.0
      %402 = vmatpush1.msra.mxu0 %v283
      %403 = vmatprep.subr.mxu0 0.0
      %404 = vmatpush1.msra.mxu0 %v284
      %405 = vmatprep.subr.mxu0 0.0
      %406 = vmatpush1.msra.mxu0 0.0
      %407 = vmatprep.subr.mxu0 0.0
      %408 = vmatpush1.msra.mxu0 0.0
      %409 = vmatprep.subr.mxu0 0.0
      %410 = vmatpush1.msra.mxu0 0.0
      %411 = vmatprep.subr.mxu0 0.0
      %412 = vmatpush1.msra.mxu0 0.0
      %413 = vmatprep.subr.mxu0 0.0
      %414 = vmatpush1.msra.mxu0 0.0
      %415 = vmatprep.subr.mxu0 0.0
      %416 = vmatpush1.msra.mxu0 0.0
      %417 = vmatprep.subr.mxu0 0.0
      %418 = vmatpush1.msra.mxu0 0.0
      %419 = vmatprep.subr.mxu0 0.0
      %420 = vmatpush1.msra.mxu0 0.0
      %421 = vmatprep.subr.mxu0 0.0
      %422 = vmatpush1.msra.mxu0 0.0
      %423 = vmatprep.subr.mxu0 0.0
      %424 = vmatpush1.msra.mxu0 0.0
      %425 = vmatprep.subr.mxu0 0.0
      %426 = vmatpush1.msra.mxu0 0.0
      %427 = vmatprep.subr.mxu0 0.0
      %428 = vmatpush1.msra.mxu0 0.0
      %429 = vmatprep.subr.mxu0 0.0
      %430 = vmatpush1.msra.mxu0 0.0
      %431 = vmatprep.subr.mxu0 0.0
      %432 = vmatpush1.msra.mxu0 0.0
      %433 = vmatprep.subr.mxu0 0.0
      %434 = vmatpush1.msra.mxu0 0.0
      %435 = vmatprep.subr.mxu0 0.0
      %436 = vmatpush1.msra.mxu0 0.0
      %437 = vmatprep.subr.mxu0 0.0
      %438 = vmatpush1.msra.mxu0 0.0
      %439 = vmatprep.subr.mxu0 0.0
      %440 = vmatpush1.msra.mxu0 0.0
      %441 = vmatprep.subr.mxu0 0.0
      %442 = vmatpush1.msra.mxu0 0.0
      %443 = vmatprep.subr.mxu0 0.0
      %444 = vmatpush1.msra.mxu0 0.0
      %445 = vmatprep.subr.mxu0 0.0
      %446 = vmatpush1.msra.mxu0 0.0
      %447 = vmatprep.subr.mxu0 0.0
      %448 = vmatpush1.msra.mxu0 0.0
      %449 = vmatprep.subr.mxu0 0.0
      %450 = vmatpush1.msra.mxu0 0.0
      %451 = vmatprep.subr.mxu0 0.0
      %452 = vmatpush1.msra.mxu0 0.0
      %453 = vmatprep.subr.mxu0 0.0
      %454 = vmatpush1.msra.mxu0 0.0
      %455 = vmatprep.subr.mxu0 0.0
      %456 = vmatpush1.msra.mxu0 0.0
      %457 = vmatprep.subr.mxu0 0.0
      %458 = vmatpush1.msra.mxu0 0.0
      %459 = vmatprep.subr.mxu0 0.0
      %460 = vmatpush1.msra.mxu0 0.0
      %461 = vmatprep.subr.mxu0 0.0
      %462 = vmatpush1.msra.mxu0 0.0
      %463 = vmatprep.subr.mxu0 0.0
      %464 = vmatpush1.msra.mxu0 0.0
      %465 = vmatprep.mubr.f32.mxu0 0.0
      %466 = vmatmul.mubr.f32.gmra.mrb[0].mxu0 %v396
      %v467 = vpop.f32.mrb[0].mxu0
      %v468 = vadd.f32 0.0, %v467
      %v469 = vpop.f32.mrb[0].mxu0
      %470 = vmatprep.mubr.f32.mxu0 0.0
      %471 = vmatmul.mubr.f32.gmra.mrb[0].mxu0 %v399
      %v472 = vpop.f32.mrb[0].mxu0
      %v473 = vadd.f32 0.0, %v472
      %v474 = vpop.f32.mrb[0].mxu0
      %475 = vdwg.mxu0
      %v477 = vsel %vm313, %v301, 0
      %v480 = vsel %vm313, %v302, 0
      %482 = vmatprep.subr.mxu0 0.0
      %483 = vmatpush1.msra.mxu0 %v285
      %484 = vmatprep.subr.mxu0 0.0
      %485 = vmatpush1.msra.mxu0 %v286
      %486 = vmatprep.subr.mxu0 0.0
      %487 = vmatpush1.msra.mxu0 0.0
      %488 = vmatprep.subr.mxu0 0.0
      %489 = vmatpush1.msra.mxu0 0.0
      %490 = vmatprep.subr.mxu0 0.0
      %491 = vmatpush1.msra.mxu0 0.0
      %492 = vmatprep.subr.mxu0 0.0
      %493 = vmatpush1.msra.mxu0 0.0
      %494 = vmatprep.subr.mxu0 0.0
      %495 = vmatpush1.msra.mxu0 0.0
      %496 = vmatprep.subr.mxu0 0.0
      %497 = vmatpush1.msra.mxu0 0.0
      %498 = vmatprep.subr.mxu0 0.0
      %499 = vmatpush1.msra.mxu0 0.0
      %500 = vmatprep.subr.mxu0 0.0
      %501 = vmatpush1.msra.mxu0 0.0
      %502 = vmatprep.subr.mxu0 0.0
      %503 = vmatpush1.msra.mxu0 0.0
      %504 = vmatprep.subr.mxu0 0.0
      %505 = vmatpush1.msra.mxu0 0.0
      %506 = vmatprep.subr.mxu0 0.0
      %507 = vmatpush1.msra.mxu0 0.0
      %508 = vmatprep.subr.mxu0 0.0
      %509 = vmatpush1.msra.mxu0 0.0
      %510 = vmatprep.subr.mxu0 0.0
      %511 = vmatpush1.msra.mxu0 0.0
      %512 = vmatprep.subr.mxu0 0.0
      %513 = vmatpush1.msra.mxu0 0.0
      %514 = vmatprep.subr.mxu0 0.0
      %515 = vmatpush1.msra.mxu0 0.0
      %516 = vmatprep.subr.mxu0 0.0
      %517 = vmatpush1.msra.mxu0 0.0
      %518 = vmatprep.subr.mxu0 0.0
      %519 = vmatpush1.msra.mxu0 0.0
      %520 = vmatprep.subr.mxu0 0.0
      %521 = vmatpush1.msra.mxu0 0.0
      %522 = vmatprep.subr.mxu0 0.0
      %523 = vmatpush1.msra.mxu0 0.0
      %524 = vmatprep.subr.mxu0 0.0
      %525 = vmatpush1.msra.mxu0 0.0
      %526 = vmatprep.subr.mxu0 0.0
      %527 = vmatpush1.msra.mxu0 0.0
      %528 = vmatprep.subr.mxu0 0.0
      %529 = vmatpush1.msra.mxu0 0.0
      %530 = vmatprep.subr.mxu0 0.0
      %531 = vmatpush1.msra.mxu0 0.0
      %532 = vmatprep.subr.mxu0 0.0
      %533 = vmatpush1.msra.mxu0 0.0
      %534 = vmatprep.subr.mxu0 0.0
      %535 = vmatpush1.msra.mxu0 0.0
      %536 = vmatprep.subr.mxu0 0.0
      %537 = vmatpush1.msra.mxu0 0.0
      %538 = vmatprep.subr.mxu0 0.0
      %539 = vmatpush1.msra.mxu0 0.0
      %540 = vmatprep.subr.mxu0 0.0
      %541 = vmatpush1.msra.mxu0 0.0
      %542 = vmatprep.subr.mxu0 0.0
      %543 = vmatpush1.msra.mxu0 0.0
      %544 = vmatprep.subr.mxu0 0.0
      %545 = vmatpush1.msra.mxu0 0.0
      %546 = vmatprep.mubr.f32.mxu0 0.0
      %547 = vmatmul.mubr.f32.gmra.mrb[0].mxu0 %v477
      %v548 = vpop.f32.mrb[0].mxu0
      %v549 = vadd.f32 0.0, %v548
      %v550 = vpop.f32.mrb[0].mxu0
      %551 = vmatprep.mubr.f32.mxu0 0.0
      %552 = vmatmul.mubr.f32.gmra.mrb[0].mxu0 %v480
      %v553 = vpop.f32.mrb[0].mxu0
      %v554 = vadd.f32 0.0, %v553
      %v555 = vpop.f32.mrb[0].mxu0
      %556 = vdwg.mxu0
      %v558 = vsel %vm313, %v303, 0
      %v561 = vsel %vm313, %v304, 0
      %563 = vmatprep.subr.mxu0 0.0
      %564 = vmatpush1.msra.mxu0 %v287
      %565 = vmatprep.subr.mxu0 0.0
      %566 = vmatpush1.msra.mxu0 %v288
      %567 = vmatprep.subr.mxu0 0.0
      %568 = vmatpush1.msra.mxu0 0.0
      %569 = vmatprep.subr.mxu0 0.0
      %570 = vmatpush1.msra.mxu0 0.0
      %571 = vmatprep.subr.mxu0 0.0
      %572 = vmatpush1.msra.mxu0 0.0
      %573 = vmatprep.subr.mxu0 0.0
      %574 = vmatpush1.msra.mxu0 0.0
      %575 = vmatprep.subr.mxu0 0.0
      %576 = vmatpush1.msra.mxu0 0.0
      %577 = vmatprep.subr.mxu0 0.0
      %578 = vmatpush1.msra.mxu0 0.0
      %579 = vmatprep.subr.mxu0 0.0
      %580 = vmatpush1.msra.mxu0 0.0
      %581 = vmatprep.subr.mxu0 0.0
      %582 = vmatpush1.msra.mxu0 0.0
      %583 = vmatprep.subr.mxu0 0.0
      %584 = vmatpush1.msra.mxu0 0.0
      %585 = vmatprep.subr.mxu0 0.0
      %586 = vmatpush1.msra.mxu0 0.0
      %587 = vmatprep.subr.mxu0 0.0
      %588 = vmatpush1.msra.mxu0 0.0
      %589 = vmatprep.subr.mxu0 0.0
      %590 = vmatpush1.msra.mxu0 0.0
      %591 = vmatprep.subr.mxu0 0.0
      %592 = vmatpush1.msra.mxu0 0.0
      %593 = vmatprep.subr.mxu0 0.0
      %594 = vmatpush1.msra.mxu0 0.0
      %595 = vmatprep.subr.mxu0 0.0
      %596 = vmatpush1.msra.mxu0 0.0
      %597 = vmatprep.subr.mxu0 0.0
      %598 = vmatpush1.msra.mxu0 0.0
      %599 = vmatprep.subr.mxu0 0.0
      %600 = vmatpush1.msra.mxu0 0.0
      %601 = vmatprep.subr.mxu0 0.0
      %602 = vmatpush1.msra.mxu0 0.0
      %603 = vmatprep.subr.mxu0 0.0
      %604 = vmatpush1.msra.mxu0 0.0
      %605 = vmatprep.subr.mxu0 0.0
      %606 = vmatpush1.msra.mxu0 0.0
      %607 = vmatprep.subr.mxu0 0.0
      %608 = vmatpush1.msra.mxu0 0.0
      %609 = vmatprep.subr.mxu0 0.0
      %610 = vmatpush1.msra.mxu0 0.0
      %611 = vmatprep.subr.mxu0 0.0
      %612 = vmatpush1.msra.mxu0 0.0
      %613 = vmatprep.subr.mxu0 0.0
      %614 = vmatpush1.msra.mxu0 0.0
      %615 = vmatprep.subr.mxu0 0.0
      %616 = vmatpush1.msra.mxu0 0.0
      %617 = vmatprep.subr.mxu0 0.0
      %618 = vmatpush1.msra.mxu0 0.0
      %619 = vmatprep.subr.mxu0 0.0
      %620 = vmatpush1.msra.mxu0 0.0
      %621 = vmatprep.subr.mxu0 0.0
      %622 = vmatpush1.msra.mxu0 0.0
      %623 = vmatprep.subr.mxu0 0.0
      %624 = vmatpush1.msra.mxu0 0.0
      %625 = vmatprep.subr.mxu0 0.0
      %626 = vmatpush1.msra.mxu0 0.0
      %627 = vmatprep.mubr.f32.mxu0 0.0
      %628 = vmatmul.mubr.f32.gmra.mrb[0].mxu0 %v558
      %v629 = vpop.f32.mrb[0].mxu0
      %v630 = vadd.f32 0.0, %v629
      %v631 = vpop.f32.mrb[0].mxu0
      %632 = vmatprep.mubr.f32.mxu0 0.0
      %633 = vmatmul.mubr.f32.gmra.mrb[0].mxu0 %v561
      %v634 = vpop.f32.mrb[0].mxu0
      %v635 = vadd.f32 0.0, %v634
      %v636 = vpop.f32.mrb[0].mxu0
      %637 = vdwg.mxu0
      %v639 = vsel %vm313, %v305, 0
      %v642 = vsel %vm313, %v306, 0
      %644 = vmatprep.subr.mxu0 0.0
      %645 = vmatpush1.msra.mxu0 %v289
      %646 = vmatprep.subr.mxu0 0.0
      %647 = vmatpush1.msra.mxu0 %v290
      %648 = vmatprep.subr.mxu0 0.0
      %649 = vmatpush1.msra.mxu0 0.0
      %650 = vmatprep.subr.mxu0 0.0
      %651 = vmatpush1.msra.mxu0 0.0
      %652 = vmatprep.subr.mxu0 0.0
      %653 = vmatpush1.msra.mxu0 0.0
      %654 = vmatprep.subr.mxu0 0.0
      %655 = vmatpush1.msra.mxu0 0.0
      %656 = vmatprep.subr.mxu0 0.0
      %657 = vmatpush1.msra.mxu0 0.0
      %658 = vmatprep.subr.mxu0 0.0
      %659 = vmatpush1.msra.mxu0 0.0
      %660 = vmatprep.subr.mxu0 0.0
      %661 = vmatpush1.msra.mxu0 0.0
      %662 = vmatprep.subr.mxu0 0.0
      %663 = vmatpush1.msra.mxu0 0.0
      %664 = vmatprep.subr.mxu0 0.0
      %665 = vmatpush1.msra.mxu0 0.0
      %666 = vmatprep.subr.mxu0 0.0
      %667 = vmatpush1.msra.mxu0 0.0
      %668 = vmatprep.subr.mxu0 0.0
      %669 = vmatpush1.msra.mxu0 0.0
      %670 = vmatprep.subr.mxu0 0.0
      %671 = vmatpush1.msra.mxu0 0.0
      %672 = vmatprep.subr.mxu0 0.0
      %673 = vmatpush1.msra.mxu0 0.0
      %674 = vmatprep.subr.mxu0 0.0
      %675 = vmatpush1.msra.mxu0 0.0
      %676 = vmatprep.subr.mxu0 0.0
      %677 = vmatpush1.msra.mxu0 0.0
      %678 = vmatprep.subr.mxu0 0.0
      %679 = vmatpush1.msra.mxu0 0.0
      %680 = vmatprep.subr.mxu0 0.0
      %681 = vmatpush1.msra.mxu0 0.0
      %682 = vmatprep.subr.mxu0 0.0
      %683 = vmatpush1.msra.mxu0 0.0
      %684 = vmatprep.subr.mxu0 0.0
      %685 = vmatpush1.msra.mxu0 0.0
      %686 = vmatprep.subr.mxu0 0.0
      %687 = vmatpush1.msra.mxu0 0.0
      %688 = vmatprep.subr.mxu0 0.0
      %689 = vmatpush1.msra.mxu0 0.0
      %690 = vmatprep.subr.mxu0 0.0
      %691 = vmatpush1.msra.mxu0 0.0
      %692 = vmatprep.subr.mxu0 0.0
      %693 = vmatpush1.msra.mxu0 0.0
      %694 = vmatprep.subr.mxu0 0.0
      %695 = vmatpush1.msra.mxu0 0.0
      %696 = vmatprep.subr.mxu0 0.0
      %697 = vmatpush1.msra.mxu0 0.0
      %698 = vmatprep.subr.mxu0 0.0
      %699 = vmatpush1.msra.mxu0 0.0
      %700 = vmatprep.subr.mxu0 0.0
      %701 = vmatpush1.msra.mxu0 0.0
      %702 = vmatprep.subr.mxu0 0.0
      %703 = vmatpush1.msra.mxu0 0.0
      %704 = vmatprep.subr.mxu0 0.0
      %705 = vmatpush1.msra.mxu0 0.0
      %706 = vmatprep.subr.mxu0 0.0
      %707 = vmatpush1.msra.mxu0 0.0
      %708 = vmatprep.mubr.f32.mxu0 0.0
      %709 = vmatmul.mubr.f32.gmra.mrb[0].mxu0 %v639
      %v710 = vpop.f32.mrb[0].mxu0
      %v711 = vadd.f32 0.0, %v710
      %v712 = vpop.f32.mrb[0].mxu0
      %713 = vmatprep.mubr.f32.mxu0 0.0
      %714 = vmatmul.mubr.f32.gmra.mrb[0].mxu0 %v642
      %v715 = vpop.f32.mrb[0].mxu0
      %v716 = vadd.f32 0.0, %v715
      %v717 = vpop.f32.mrb[0].mxu0
      %718 = vdwg.mxu0
      %v720 = vsel %vm313, %v307, 0
      %v723 = vsel %vm313, %v308, 0
      %725 = vmatprep.subr.mxu0 0.0
      %726 = vmatpush1.msra.mxu0 %v291
      %727 = vmatprep.subr.mxu0 0.0
      %728 = vmatpush1.msra.mxu0 %v292
      %729 = vmatprep.subr.mxu0 0.0
      %730 = vmatpush1.msra.mxu0 0.0
      %731 = vmatprep.subr.mxu0 0.0
      %732 = vmatpush1.msra.mxu0 0.0
      %733 = vmatprep.subr.mxu0 0.0
      %734 = vmatpush1.msra.mxu0 0.0
      %735 = vmatprep.subr.mxu0 0.0
      %736 = vmatpush1.msra.mxu0 0.0
      %737 = vmatprep.subr.mxu0 0.0
      %738 = vmatpush1.msra.mxu0 0.0
      %739 = vmatprep.subr.mxu0 0.0
      %740 = vmatpush1.msra.mxu0 0.0
      %741 = vmatprep.subr.mxu0 0.0
      %742 = vmatpush1.msra.mxu0 0.0
      %743 = vmatprep.subr.mxu0 0.0
      %744 = vmatpush1.msra.mxu0 0.0
      %745 = vmatprep.subr.mxu0 0.0
      %746 = vmatpush1.msra.mxu0 0.0
      %747 = vmatprep.subr.mxu0 0.0
      %748 = vmatpush1.msra.mxu0 0.0
      %749 = vmatprep.subr.mxu0 0.0
      %750 = vmatpush1.msra.mxu0 0.0
      %751 = vmatprep.subr.mxu0 0.0
      %752 = vmatpush1.msra.mxu0 0.0
      %753 = vmatprep.subr.mxu0 0.0
      %754 = vmatpush1.msra.mxu0 0.0
      %755 = vmatprep.subr.mxu0 0.0
      %756 = vmatpush1.msra.mxu0 0.0
      %757 = vmatprep.subr.mxu0 0.0
      %758 = vmatpush1.msra.mxu0 0.0
      %759 = vmatprep.subr.mxu0 0.0
      %760 = vmatpush1.msra.mxu0 0.0
      %761 = vmatprep.subr.mxu0 0.0
      %762 = vmatpush1.msra.mxu0 0.0
      %763 = vmatprep.subr.mxu0 0.0
      %764 = vmatpush1.msra.mxu0 0.0
      %765 = vmatprep.subr.mxu0 0.0
      %766 = vmatpush1.msra.mxu0 0.0
      %767 = vmatprep.subr.mxu0 0.0
      %768 = vmatpush1.msra.mxu0 0.0
      %769 = vmatprep.subr.mxu0 0.0
      %770 = vmatpush1.msra.mxu0 0.0
      %771 = vmatprep.subr.mxu0 0.0
      %772 = vmatpush1.msra.mxu0 0.0
      %773 = vmatprep.subr.mxu0 0.0
      %774 = vmatpush1.msra.mxu0 0.0
      %775 = vmatprep.subr.mxu0 0.0
      %776 = vmatpush1.msra.mxu0 0.0
      %777 = vmatprep.subr.mxu0 0.0
      %778 = vmatpush1.msra.mxu0 0.0
      %779 = vmatprep.subr.mxu0 0.0
      %780 = vmatpush1.msra.mxu0 0.0
      %781 = vmatprep.subr.mxu0 0.0
      %782 = vmatpush1.msra.mxu0 0.0
      %783 = vmatprep.subr.mxu0 0.0
      %784 = vmatpush1.msra.mxu0 0.0
      %785 = vmatprep.subr.mxu0 0.0
      %786 = vmatpush1.msra.mxu0 0.0
      %787 = vmatprep.subr.mxu0 0.0
      %788 = vmatpush1.msra.mxu0 0.0
      %789 = vmatprep.mubr.f32.mxu0 0.0
      %790 = vmatmul.mubr.f32.gmra.mrb[0].mxu0 %v720
      %v791 = vpop.f32.mrb[0].mxu0
      %v792 = vadd.f32 0.0, %v791
      %v793 = vpop.f32.mrb[0].mxu0
      %794 = vmatprep.mubr.f32.mxu0 0.0
      %795 = vmatmul.mubr.f32.gmra.mrb[0].mxu0 %v723
      %v796 = vpop.f32.mrb[0].mxu0
      %v797 = vadd.f32 0.0, %v796
      %v798 = vpop.f32.mrb[0].mxu0
      %799 = vdwg.mxu0
      %v801 = vsel %vm313, %v309, 0
      %v804 = vsel %vm313, %v310, 0
      %806 = vmatprep.subr.mxu0 0.0
      %807 = vmatpush1.msra.mxu0 %v293
      %808 = vmatprep.subr.mxu0 0.0
      %809 = vmatpush1.msra.mxu0 %v294
      %810 = vmatprep.subr.mxu0 0.0
      %811 = vmatpush1.msra.mxu0 0.0
      %812 = vmatprep.subr.mxu0 0.0
      %813 = vmatpush1.msra.mxu0 0.0
      %814 = vmatprep.subr.mxu0 0.0
      %815 = vmatpush1.msra.mxu0 0.0
      %816 = vmatprep.subr.mxu0 0.0
      %817 = vmatpush1.msra.mxu0 0.0
      %818 = vmatprep.subr.mxu0 0.0
      %819 = vmatpush1.msra.mxu0 0.0
      %820 = vmatprep.subr.mxu0 0.0
      %821 = vmatpush1.msra.mxu0 0.0
      %822 = vmatprep.subr.mxu0 0.0
      %823 = vmatpush1.msra.mxu0 0.0
      %824 = vmatprep.subr.mxu0 0.0
      %825 = vmatpush1.msra.mxu0 0.0
      %826 = vmatprep.subr.mxu0 0.0
      %827 = vmatpush1.msra.mxu0 0.0
      %828 = vmatprep.subr.mxu0 0.0
      %829 = vmatpush1.msra.mxu0 0.0
      %830 = vmatprep.subr.mxu0 0.0
      %831 = vmatpush1.msra.mxu0 0.0
      %832 = vmatprep.subr.mxu0 0.0
      %833 = vmatpush1.msra.mxu0 0.0
      %834 = vmatprep.subr.mxu0 0.0
      %835 = vmatpush1.msra.mxu0 0.0
      %836 = vmatprep.subr.mxu0 0.0
      %837 = vmatpush1.msra.mxu0 0.0
      %838 = vmatprep.subr.mxu0 0.0
      %839 = vmatpush1.msra.mxu0 0.0
      %840 = vmatprep.subr.mxu0 0.0
      %841 = vmatpush1.msra.mxu0 0.0
      %842 = vmatprep.subr.mxu0 0.0
      %843 = vmatpush1.msra.mxu0 0.0
      %844 = vmatprep.subr.mxu0 0.0
      %845 = vmatpush1.msra.mxu0 0.0
      %846 = vmatprep.subr.mxu0 0.0
      %847 = vmatpush1.msra.mxu0 0.0
      %848 = vmatprep.subr.mxu0 0.0
      %849 = vmatpush1.msra.mxu0 0.0
      %850 = vmatprep.subr.mxu0 0.0
      %851 = vmatpush1.msra.mxu0 0.0
      %852 = vmatprep.subr.mxu0 0.0
      %853 = vmatpush1.msra.mxu0 0.0
      %854 = vmatprep.subr.mxu0 0.0
      %855 = vmatpush1.msra.mxu0 0.0
      %856 = vmatprep.subr.mxu0 0.0
      %857 = vmatpush1.msra.mxu0 0.0
      %858 = vmatprep.subr.mxu0 0.0
      %859 = vmatpush1.msra.mxu0 0.0
      %860 = vmatprep.subr.mxu0 0.0
      %861 = vmatpush1.msra.mxu0 0.0
      %862 = vmatprep.subr.mxu0 0.0
      %863 = vmatpush1.msra.mxu0 0.0
      %864 = vmatprep.subr.mxu0 0.0
      %865 = vmatpush1.msra.mxu0 0.0
      %866 = vmatprep.subr.mxu0 0.0
      %867 = vmatpush1.msra.mxu0 0.0
      %868 = vmatprep.subr.mxu0 0.0
      %869 = vmatpush1.msra.mxu0 0.0
      %870 = vmatprep.mubr.f32.mxu0 0.0
      %871 = vmatmul.mubr.f32.gmra.mrb[0].mxu0 %v801
      %v872 = vpop.f32.mrb[0].mxu0
      %v873 = vadd.f32 0.0, %v872
      %v874 = vpop.f32.mrb[0].mxu0
      %875 = vmatprep.mubr.f32.mxu0 0.0
      %876 = vmatmul.mubr.f32.gmra.mrb[0].mxu0 %v804
      %v877 = vpop.f32.mrb[0].mxu0
      %v878 = vadd.f32 0.0, %v877
      %v879 = vpop.f32.mrb[0].mxu0
      %880 = vdwg.mxu0
      %v882 = vsel %vm313, %v311, 0
      %v885 = vsel %vm313, %v312, 0
      %887 = vmatprep.subr.mxu0 0.0
      %888 = vmatpush1.msra.mxu0 %v295
      %889 = vmatprep.subr.mxu0 0.0
      %890 = vmatpush1.msra.mxu0 %v296
      %891 = vmatprep.subr.mxu0 0.0
      %892 = vmatpush1.msra.mxu0 0.0
      %893 = vmatprep.subr.mxu0 0.0
      %894 = vmatpush1.msra.mxu0 0.0
      %895 = vmatprep.subr.mxu0 0.0
      %896 = vmatpush1.msra.mxu0 0.0
      %897 = vmatprep.subr.mxu0 0.0
      %898 = vmatpush1.msra.mxu0 0.0
      %899 = vmatprep.subr.mxu0 0.0
      %900 = vmatpush1.msra.mxu0 0.0
      %901 = vmatprep.subr.mxu0 0.0
      %902 = vmatpush1.msra.mxu0 0.0
      %903 = vmatprep.subr.mxu0 0.0
      %904 = vmatpush1.msra.mxu0 0.0
      %905 = vmatprep.subr.mxu0 0.0
      %906 = vmatpush1.msra.mxu0 0.0
      %907 = vmatprep.subr.mxu0 0.0
      %908 = vmatpush1.msra.mxu0 0.0
      %909 = vmatprep.subr.mxu0 0.0
      %910 = vmatpush1.msra.mxu0 0.0
      %911 = vmatprep.subr.mxu0 0.0
      %912 = vmatpush1.msra.mxu0 0.0
      %913 = vmatprep.subr.mxu0 0.0
      %914 = vmatpush1.msra.mxu0 0.0
      %915 = vmatprep.subr.mxu0 0.0
      %916 = vmatpush1.msra.mxu0 0.0
      %917 = vmatprep.subr.mxu0 0.0
      %918 = vmatpush1.msra.mxu0 0.0
      %919 = vmatprep.subr.mxu0 0.0
      %920 = vmatpush1.msra.mxu0 0.0
      %921 = vmatprep.subr.mxu0 0.0
      %922 = vmatpush1.msra.mxu0 0.0
      %923 = vmatprep.subr.mxu0 0.0
      %924 = vmatpush1.msra.mxu0 0.0
      %925 = vmatprep.subr.mxu0 0.0
      %926 = vmatpush1.msra.mxu0 0.0
      %927 = vmatprep.subr.mxu0 0.0
      %928 = vmatpush1.msra.mxu0 0.0
      %929 = vmatprep.subr.mxu0 0.0
      %930 = vmatpush1.msra.mxu0 0.0
      %931 = vmatprep.subr.mxu0 0.0
      %932 = vmatpush1.msra.mxu0 0.0
      %933 = vmatprep.subr.mxu0 0.0
      %934 = vmatpush1.msra.mxu0 0.0
      %935 = vmatprep.subr.mxu0 0.0
      %936 = vmatpush1.msra.mxu0 0.0
      %937 = vmatprep.subr.mxu0 0.0
      %938 = vmatpush1.msra.mxu0 0.0
      %939 = vmatprep.subr.mxu0 0.0
      %940 = vmatpush1.msra.mxu0 0.0
      %941 = vmatprep.subr.mxu0 0.0
      %942 = vmatpush1.msra.mxu0 0.0
      %943 = vmatprep.subr.mxu0 0.0
      %944 = vmatpush1.msra.mxu0 0.0
      %945 = vmatprep.subr.mxu0 0.0
      %946 = vmatpush1.msra.mxu0 0.0
      %947 = vmatprep.subr.mxu0 0.0
      %948 = vmatpush1.msra.mxu0 0.0
      %949 = vmatprep.subr.mxu0 0.0
      %950 = vmatpush1.msra.mxu0 0.0
      %951 = vmatprep.mubr.f32.mxu0 0.0
      %952 = vmatmul.mubr.f32.gmra.mrb[0].mxu0 %v882
      %v953 = vpop.f32.mrb[0].mxu0
      %v954 = vadd.f32 0.0, %v953
      %v955 = vpop.f32.mrb[0].mxu0
      %956 = vmatprep.mubr.f32.mxu0 0.0
      %957 = vmatmul.mubr.f32.gmra.mrb[0].mxu0 %v885
      %v958 = vpop.f32.mrb[0].mxu0
      %v959 = vadd.f32 0.0, %v958
      %v960 = vpop.f32.mrb[0].mxu0
      %961 = vdwg.mxu0
      %978 = vrot.lane.b32.xlu0 %v281, 4
      %v979 = vpop.permute.xlu0 %978
      %980 = vrot.lane.b32.xlu0 %v282, 4
      %v981 = vpop.permute.xlu0 %980
      %982 = vrot.lane.b32.xlu0 %v283, 4
      %v983 = vpop.permute.xlu0 %982
      %984 = vrot.lane.b32.xlu0 %v284, 4
      %v985 = vpop.permute.xlu0 %984
      %986 = vrot.lane.b32.xlu0 %v285, 4
      %v987 = vpop.permute.xlu0 %986
      %988 = vrot.lane.b32.xlu0 %v286, 4
      %v989 = vpop.permute.xlu0 %988
      %990 = vrot.lane.b32.xlu0 %v287, 4
      %v991 = vpop.permute.xlu0 %990
      %992 = vrot.lane.b32.xlu0 %v288, 4
      %v993 = vpop.permute.xlu0 %992
      %994 = vrot.lane.b32.xlu0 %v289, 4
      %v995 = vpop.permute.xlu0 %994
      %996 = vrot.lane.b32.xlu0 %v290, 4
      %v997 = vpop.permute.xlu0 %996
      %998 = vrot.lane.b32.xlu0 %v291, 4
      %v999 = vpop.permute.xlu0 %998
      %1000 = vrot.lane.b32.xlu0 %v292, 4
      %v1001 = vpop.permute.xlu0 %1000
      %1002 = vrot.lane.b32.xlu0 %v293, 4
      %v1003 = vpop.permute.xlu0 %1002
      %1004 = vrot.lane.b32.xlu0 %v294, 4
      %v1005 = vpop.permute.xlu0 %1004
      %1006 = vrot.lane.b32.xlu0 %v295, 4
      %v1007 = vpop.permute.xlu0 %1006
      %1008 = vrot.lane.b32.xlu0 %v296, 4
      %v1009 = vpop.permute.xlu0 %1008
      %vm1026 = vcmask 31744
      %v1027 = vsel %vm1026, %v387, %v979
      %v1028 = vsel %vm1026, %v392, %v981
      %v1029 = vsel %vm1026, %v468, %v983
      %v1030 = vsel %vm1026, %v473, %v985
      %v1031 = vsel %vm1026, %v549, %v987
      %v1032 = vsel %vm1026, %v554, %v989
      %v1033 = vsel %vm1026, %v630, %v991
      %v1034 = vsel %vm1026, %v635, %v993
      %v1035 = vsel %vm1026, %v711, %v995
      %v1036 = vsel %vm1026, %v716, %v997
      %v1037 = vsel %vm1026, %v792, %v999
      %v1038 = vsel %vm1026, %v797, %v1001
      %v1039 = vsel %vm1026, %v873, %v1003
      %v1040 = vsel %vm1026, %v878, %v1005
      %v1041 = vsel %vm1026, %v954, %v1007
      %v1042 = vsel %vm1026, %v959, %v1009
      %v1043 = vld [vmem:[%s2] sm:$0xff]
      %v1044 = vld [vmem:[%s3] sm:$0x1]
      %v1046 = vlaneseq
      %v1047 = vshrl.u32 %v1046, 7
      %v1048 = vsub.s32 0, %v1047
      %v1049 = vrot.slane %v1044, %v1048
      %vm1051 = vcmask 64512
      %v1053 = vsel %vm1051, %v1027, 0
      %v1056 = vsel %vm1051, %v1028, 0
      %v1059 = vsel %vm1051, %v1029, 0
      %v1062 = vsel %vm1051, %v1030, 0
      %v1065 = vsel %vm1051, %v1031, 0
      %v1068 = vsel %vm1051, %v1032, 0
      %v1071 = vsel %vm1051, %v1033, 0
      %v1074 = vsel %vm1051, %v1034, 0
      %v1077 = vsel %vm1051, %v1035, 0
      %v1080 = vsel %vm1051, %v1036, 0
      %v1083 = vsel %vm1051, %v1037, 0
      %v1086 = vsel %vm1051, %v1038, 0
      %v1089 = vsel %vm1051, %v1039, 0
      %v1092 = vsel %vm1051, %v1040, 0
      %v1095 = vsel %vm1051, %v1041, 0
      %v1098 = vsel %vm1051, %v1042, 0
      %1100 = vmatprep.subr.mxu0 0.0
      %1101 = vmatpush1.msra.mxu0 %v1043
      %1102 = vmatprep.subr.mxu0 0.0
      %1103 = vmatpush1.msra.mxu0 0.0
      %1104 = vmatprep.subr.mxu0 0.0
      %1105 = vmatpush1.msra.mxu0 0.0
      %1106 = vmatprep.subr.mxu0 0.0
      %1107 = vmatpush1.msra.mxu0 0.0
      %1108 = vmatprep.subr.mxu0 0.0
      %1109 = vmatpush1.msra.mxu0 0.0
      %1110 = vmatprep.subr.mxu0 0.0
      %1111 = vmatpush1.msra.mxu0 0.0
      %1112 = vmatprep.subr.mxu0 0.0
      %1113 = vmatpush1.msra.mxu0 0.0
      %1114 = vmatprep.subr.mxu0 0.0
      %1115 = vmatpush1.msra.mxu0 0.0
      %1116 = vmatprep.subr.mxu0 0.0
      %1117 = vmatpush1.msra.mxu0 0.0
      %1118 = vmatprep.subr.mxu0 0.0
      %1119 = vmatpush1.msra.mxu0 0.0
      %1120 = vmatprep.subr.mxu0 0.0
      %1121 = vmatpush1.msra.mxu0 0.0
      %1122 = vmatprep.subr.mxu0 0.0
      %1123 = vmatpush1.msra.mxu0 0.0
      %1124 = vmatprep.subr.mxu0 0.0
      %1125 = vmatpush1.msra.mxu0 0.0
      %1126 = vmatprep.subr.mxu0 0.0
      %1127 = vmatpush1.msra.mxu0 0.0
      %1128 = vmatprep.subr.mxu0 0.0
      %1129 = vmatpush1.msra.mxu0 0.0
      %1130 = vmatprep.subr.mxu0 0.0
      %1131 = vmatpush1.msra.mxu0 0.0
      %1132 = vmatprep.subr.mxu0 0.0
      %1133 = vmatpush1.msra.mxu0 0.0
      %1134 = vmatprep.subr.mxu0 0.0
      %1135 = vmatpush1.msra.mxu0 0.0
      %1136 = vmatprep.subr.mxu0 0.0
      %1137 = vmatpush1.msra.mxu0 0.0
      %1138 = vmatprep.subr.mxu0 0.0
      %1139 = vmatpush1.msra.mxu0 0.0
      %1140 = vmatprep.subr.mxu0 0.0
      %1141 = vmatpush1.msra.mxu0 0.0
      %1142 = vmatprep.subr.mxu0 0.0
      %1143 = vmatpush1.msra.mxu0 0.0
      %1144 = vmatprep.subr.mxu0 0.0
      %1145 = vmatpush1.msra.mxu0 0.0
      %1146 = vmatprep.subr.mxu0 0.0
      %1147 = vmatpush1.msra.mxu0 0.0
      %1148 = vmatprep.subr.mxu0 0.0
      %1149 = vmatpush1.msra.mxu0 0.0
      %1150 = vmatprep.subr.mxu0 0.0
      %1151 = vmatpush1.msra.mxu0 0.0
      %1152 = vmatprep.subr.mxu0 0.0
      %1153 = vmatpush1.msra.mxu0 0.0
      %1154 = vmatprep.subr.mxu0 0.0
      %1155 = vmatpush1.msra.mxu0 0.0
      %1156 = vmatprep.subr.mxu0 0.0
      %1157 = vmatpush1.msra.mxu0 0.0
      %1158 = vmatprep.subr.mxu0 0.0
      %1159 = vmatpush1.msra.mxu0 0.0
      %1160 = vmatprep.subr.mxu0 0.0
      %1161 = vmatpush1.msra.mxu0 0.0
      %1162 = vmatprep.subr.mxu0 0.0
      %1163 = vmatpush1.msra.mxu0 0.0
      %1164 = vmatprep.mubr.f32.mxu0 0.0
      %1165 = vmatmul.mubr.f32.gmra.mrb[0].mxu0 %v1053
      %v1166 = vpop.f32.mrb[0].mxu0
      %v1167 = vadd.f32 %v1049, %v1166
      %v1168 = vpop.f32.mrb[0].mxu0
      %1169 = vmatprep.mubr.f32.mxu0 0.0
      %1170 = vmatmul.mubr.f32.gmra.mrb[0].mxu0 %v1056
      %v1171 = vpop.f32.mrb[0].mxu0
      %v1172 = vadd.f32 %v1049, %v1171
      %v1173 = vpop.f32.mrb[0].mxu0
      %1174 = vmatprep.mubr.f32.mxu0 0.0
      %1175 = vmatmul.mubr.f32.gmra.mrb[0].mxu0 %v1059
      %v1176 = vpop.f32.mrb[0].mxu0
      %v1177 = vadd.f32 %v1049, %v1176
      %v1178 = vpop.f32.mrb[0].mxu0
      %1179 = vmatprep.mubr.f32.mxu0 0.0
      %1180 = vmatmul.mubr.f32.gmra.mrb[0].mxu0 %v1062
      %v1181 = vpop.f32.mrb[0].mxu0
      %v1182 = vadd.f32 %v1049, %v1181
      %v1183 = vpop.f32.mrb[0].mxu0
      %1184 = vmatprep.mubr.f32.mxu0 0.0
      %1185 = vmatmul.mubr.f32.gmra.mrb[0].mxu0 %v1065
      %v1186 = vpop.f32.mrb[0].mxu0
      %v1187 = vadd.f32 %v1049, %v1186
      %v1188 = vpop.f32.mrb[0].mxu0
      %1189 = vmatprep.mubr.f32.mxu0 0.0
      %1190 = vmatmul.mubr.f32.gmra.mrb[0].mxu0 %v1068
      %v1191 = vpop.f32.mrb[0].mxu0
      %v1192 = vadd.f32 %v1049, %v1191
      %v1193 = vpop.f32.mrb[0].mxu0
      %1194 = vmatprep.mubr.f32.mxu0 0.0
      %1195 = vmatmul.mubr.f32.gmra.mrb[0].mxu0 %v1071
      %v1196 = vpop.f32.mrb[0].mxu0
      %v1197 = vadd.f32 %v1049, %v1196
      %v1198 = vpop.f32.mrb[0].mxu0
      %1199 = vmatprep.mubr.f32.mxu0 0.0
      %1200 = vmatmul.mubr.f32.gmra.mrb[0].mxu0 %v1074
      %v1201 = vpop.f32.mrb[0].mxu0
      %v1202 = vadd.f32 %v1049, %v1201
      %v1203 = vpop.f32.mrb[0].mxu0
      %1204 = vmatprep.mubr.f32.mxu0 0.0
      %1205 = vmatmul.mubr.f32.gmra.mrb[0].mxu0 %v1077
      %v1206 = vpop.f32.mrb[0].mxu0
      %v1207 = vadd.f32 %v1049, %v1206
      %v1208 = vpop.f32.mrb[0].mxu0
      %1209 = vmatprep.mubr.f32.mxu0 0.0
      %1210 = vmatmul.mubr.f32.gmra.mrb[0].mxu0 %v1080
      %v1211 = vpop.f32.mrb[0].mxu0
      %v1212 = vadd.f32 %v1049, %v1211
      %v1213 = vpop.f32.mrb[0].mxu0
      %1214 = vmatprep.mubr.f32.mxu0 0.0
      %1215 = vmatmul.mubr.f32.gmra.mrb[0].mxu0 %v1083
      %v1216 = vpop.f32.mrb[0].mxu0
      %v1217 = vadd.f32 %v1049, %v1216
      %v1218 = vpop.f32.mrb[0].mxu0
      %1219 = vmatprep.mubr.f32.mxu0 0.0
      %1220 = vmatmul.mubr.f32.gmra.mrb[0].mxu0 %v1086
      %v1221 = vpop.f32.mrb[0].mxu0
      %v1222 = vadd.f32 %v1049, %v1221
      %v1223 = vpop.f32.mrb[0].mxu0
      %1224 = vmatprep.mubr.f32.mxu0 0.0
      %1225 = vmatmul.mubr.f32.gmra.mrb[0].mxu0 %v1089
      %v1226 = vpop.f32.mrb[0].mxu0
      %v1227 = vadd.f32 %v1049, %v1226
      %v1228 = vpop.f32.mrb[0].mxu0
      %1229 = vmatprep.mubr.f32.mxu0 0.0
      %1230 = vmatmul.mubr.f32.gmra.mrb[0].mxu0 %v1092
      %v1231 = vpop.f32.mrb[0].mxu0
      %v1232 = vadd.f32 %v1049, %v1231
      %v1233 = vpop.f32.mrb[0].mxu0
      %1234 = vmatprep.mubr.f32.mxu0 0.0
      %1235 = vmatmul.mubr.f32.gmra.mrb[0].mxu0 %v1095
      %v1236 = vpop.f32.mrb[0].mxu0
      %v1237 = vadd.f32 %v1049, %v1236
      %v1238 = vpop.f32.mrb[0].mxu0
      %1239 = vmatprep.mubr.f32.mxu0 0.0
      %1240 = vmatmul.mubr.f32.gmra.mrb[0].mxu0 %v1098
      %v1241 = vpop.f32.mrb[0].mxu0
      %v1242 = vadd.f32 %v1049, %v1241
      %v1243 = vpop.f32.mrb[0].mxu0
      %1244 = vdwg.mxu0
      %v1245 = vmax.f32 %v1167, 0.0
      %v1246 = vmax.f32 %v1172, 0.0
      %v1247 = vmax.f32 %v1177, 0.0
      %v1248 = vmax.f32 %v1182, 0.0
      %v1249 = vmax.f32 %v1187, 0.0
      %v1250 = vmax.f32 %v1192, 0.0
      %v1251 = vmax.f32 %v1197, 0.0
      %v1252 = vmax.f32 %v1202, 0.0
      %v1253 = vmax.f32 %v1207, 0.0
      %v1254 = vmax.f32 %v1212, 0.0
      %v1255 = vmax.f32 %v1217, 0.0
      %v1256 = vmax.f32 %v1222, 0.0
      %v1257 = vmax.f32 %v1227, 0.0
      %v1258 = vmax.f32 %v1232, 0.0
      %v1259 = vmax.f32 %v1237, 0.0
      %v1260 = vmax.f32 %v1242, 0.0
      %1261 = vst.msk [vmem:[%s279] sm:$0xff] %vm1051, %v1245
      %1262 = vst.msk [vmem:[%s279 + $0x8] sm:$0xff] %vm1051, %v1246
      %1263 = vst.msk [vmem:[%s279 + $0x10] sm:$0xff] %vm1051, %v1247
      %1264 = vst.msk [vmem:[%s279 + $0x18] sm:$0xff] %vm1051, %v1248
      %1265 = vst.msk [vmem:[%s279 + $0x20] sm:$0xff] %vm1051, %v1249
      %1266 = vst.msk [vmem:[%s279 + $0x28] sm:$0xff] %vm1051, %v1250
      %1267 = vst.msk [vmem:[%s279 + $0x30] sm:$0xff] %vm1051, %v1251
      %1268 = vst.msk [vmem:[%s279 + $0x38] sm:$0xff] %vm1051, %v1252
      %1269 = vst.msk [vmem:[%s279 + $0x40] sm:$0xff] %vm1051, %v1253
      %1270 = vst.msk [vmem:[%s279 + $0x48] sm:$0xff] %vm1051, %v1254
      %1271 = vst.msk [vmem:[%s279 + $0x50] sm:$0xff] %vm1051, %v1255
      %1272 = vst.msk [vmem:[%s279 + $0x58] sm:$0xff] %vm1051, %v1256
      %1273 = vst.msk [vmem:[%s279 + $0x60] sm:$0xff] %vm1051, %v1257
      %1274 = vst.msk [vmem:[%s279 + $0x68] sm:$0xff] %vm1051, %v1258
      %1275 = vst.msk [vmem:[%s279 + $0x70] sm:$0xff] %vm1051, %v1259
      %1276 = vst.msk [vmem:[%s279 + $0x78] sm:$0xff] %vm1051, %v1260
      %s1277 = smul.u32 8, %s20
      %p1278 = scmp.lt.s32.totalorder %s19, 1
      %s1279 = scalar_select %p1278, %s19, 1
      %p1280 = scmp.lt.s32.totalorder %s1277, 7
      %s1281 = scalar_select %p1280, %s1277, 7
      %s1282 = smul.addr %s1281, 2
      %s1283 = smul.addr %s1279, 16
      %s1284 = sadd.s32 %s1282, %s1283
      %s1285 = smul.addr %s1284, 8
      %s1286 = scalar_lea.vmem %s4, %s1285
      // Predicated region
      $region37: #{tpu_custom_call.1} parent=35 // pred_check
        %p1287 = pneg %p145
      $region38: #{tpu_custom_call.1} parent=35 // pred_check_branch
        %1289 = sbr.rel (%p1287) target = $region40
      $region39: #{tpu_custom_call.1} parent=35 // pred_region
        %s1290 = smul.u32 8, %s20
      $region40: #{tpu_custom_call.1} parent=35 // pred_fallthru
        _
    $region36: #{tpu_custom_call.1} parent=5 // pred_fallthru
      _
    %p1291 = scmp.le.s32.totalorder 2, %s10
    // Predicated region
    $region41: #{tpu_custom_call.1} parent=5 // pred_check
      %p1292 = pneg %p1291
    $region42: #{tpu_custom_call.1} parent=5 // pred_check_branch
      %1294 = sbr.rel (%p1292) target = $region44
    $region43: #{tpu_custom_call.1} parent=5 // pred_region
      %s1295 = ssub.s32 %s10, 2
      // Predicated region
      $region45: #{tpu_custom_call.1} parent=43 // pred_check
        %p1296 = pneg %p151
      $region46: #{tpu_custom_call.1} parent=43 // pred_check_branch
        %1298 = sbr.rel (%p1296) target = $region48
      $region47: #{tpu_custom_call.1} parent=43 // pred_region
        %s1299 = smul.u32 8, %s22
        %p1300 = scmp.lt.s32.totalorder %s21, 1
        %s1301 = scalar_select %p1300, %s21, 1
        %p1302 = scmp.lt.s32.totalorder %s1299, 7
        %s1303 = scalar_select %p1302, %s1299, 7
        %s1304 = smul.addr %s1303, 2
        %s1305 = smul.addr %s1301, 16
        %s1306 = sadd.s32 %s1304, %s1305
        %s1307 = smul.addr %s1306, 8
        %s1308 = scalar_lea.vmem %s4, %s1307
      $region48: #{tpu_custom_call.1} parent=43 // pred_fallthru
        _
    $region44: #{tpu_custom_call.1} parent=5 // pred_fallthru
      _
  $region6: #{tpu_custom_call.1} parent=0 // loop_footer
    %s14 = sadd.s32 1, %s10
  $region7: #{tpu_custom_call.1} parent=0 // loop_footer_branch
    %9 = sbr.rel target = $region3
  $region8: #{tpu_custom_call.1} parent=0 // loop_exit
    _

</llo_original>
